<compile_context>
chip_gen: v7x
topology: tpu7x:2x2x1
jax: 0.10.0
libtpu: 0.0.40
codegen_flags: <defaults>
</compile_context>

<pallas_src>
import functools

import jax
import jax.numpy as jnp
from jax.experimental import pallas as pl
from jax.experimental.pallas import tpu as pltpu

INPUT_DIM = 13     # Wine dataset: 13 features
HIDDEN_DIM = 64
OUTPUT_DIM = 3     # Wine dataset: 3 classes
OUT_PAD = 8        # narrow padded output width (equals full out array last dim)

DEFAULT_TILE_B = 2048   # rows per grid step for large batches (multiple of 8)


def _round_up(n, m):
    return ((n + m - 1) // m) * m


def _mlp_kernel(x_ref, w1_ref, b1_ref, w2_ref, b2_ref, w3_ref, b3_ref, o_ref):
    x = x_ref[...]
    # Layer 1: Linear(13, 64) + ReLU   (MXU matmul, f32 accumulation)
    h1 = jnp.dot(x, w1_ref[...], preferred_element_type=jnp.float32) + b1_ref[...]
    h1 = jnp.maximum(h1, 0.0)
    # Layer 2: Linear(64, 64) + ReLU
    h2 = jnp.dot(h1, w2_ref[...], preferred_element_type=jnp.float32) + b2_ref[...]
    h2 = jnp.maximum(h2, 0.0)
    # Layer 3: Linear(64, OUT_PAD) -> logits live in the first 3 lanes.
    o_ref[...] = jnp.dot(h2, w3_ref[...], preferred_element_type=jnp.float32) + b3_ref[...]


def prepare_params(params):
    """One-time padding of the output layer to OUT_PAD columns (do outside jit)."""
    if params["w3"].shape[1] == OUT_PAD:
        return params
    w3p = jnp.zeros((HIDDEN_DIM, OUT_PAD), jnp.float32).at[:, :OUTPUT_DIM].set(params["w3"])
    b3p = jnp.zeros((1, OUT_PAD), jnp.float32).at[:, :OUTPUT_DIM].set(params["b3"])
    out = dict(params)
    out["w3"], out["b3"] = w3p, b3p
    return out


@functools.partial(jax.jit, static_argnames=("tile_b",))
def wine_classifier_forward(x, params, tile_b=DEFAULT_TILE_B):
    """x: (batch, INPUT_DIM) f32; params: dict of weights/biases. Returns (batch, 3) logits."""
    w1, b1 = params["w1"], params["b1"]
    w2, b2 = params["w2"], params["b2"]
    w3, b3 = params["w3"], params["b3"]

    # Fallback pad (no-op if params were already prepared with prepare_params).
    if w3.shape[1] != OUT_PAD:
        w3 = jnp.zeros((HIDDEN_DIM, OUT_PAD), jnp.float32).at[:, :OUTPUT_DIM].set(w3)
        b3 = jnp.zeros((1, OUT_PAD), jnp.float32).at[:, :OUTPUT_DIM].set(b3)

    batch = x.shape[0]

    # Batch tile: multiple of 8 (f32 sublane) when batch > 8, otherwise the
    # whole (tiny) batch as a single block (block dim == full array dim is
    # legal).  Keep >= 2 grid steps when possible so v7x's two TensorCores
    # both get work; cap at tile_b so the double-buffered footprint stays
    # well inside a 32 MiB scoped VMEM limit on every generation.
    tile_b = max(8, (tile_b // 8) * 8)
    if batch <= 8:
        tb = batch
    else:
        tb = min(tile_b, _round_up(pl.cdiv(batch, 2), 8))
    grid = (pl.cdiv(batch, tb),)

    const = lambda i: (0, 0)     # weights/biases resident across all grid steps

    flops = 2 * batch * (INPUT_DIM * HIDDEN_DIM
                         + HIDDEN_DIM * HIDDEN_DIM
                         + HIDDEN_DIM * OUT_PAD)
    weight_bytes = 4 * (INPUT_DIM * HIDDEN_DIM + HIDDEN_DIM
                        + HIDDEN_DIM * HIDDEN_DIM + HIDDEN_DIM
                        + HIDDEN_DIM * OUT_PAD + OUT_PAD)
    bytes_accessed = batch * (INPUT_DIM + OUT_PAD) * 4 + weight_bytes

    out = pl.pallas_call(
        _mlp_kernel,
        out_shape=jax.ShapeDtypeStruct((batch, OUT_PAD), jnp.float32),
        grid=grid,
        in_specs=[
            pl.BlockSpec((tb, INPUT_DIM), lambda i: (i, 0)),           # x (streamed)
            pl.BlockSpec((INPUT_DIM, HIDDEN_DIM), const),              # w1 (resident)
            pl.BlockSpec((1, HIDDEN_DIM), const),                      # b1
            pl.BlockSpec((HIDDEN_DIM, HIDDEN_DIM), const),             # w2
            pl.BlockSpec((1, HIDDEN_DIM), const),                      # b2
            pl.BlockSpec((HIDDEN_DIM, OUT_PAD), const),                # w3 (padded, narrow)
            pl.BlockSpec((1, OUT_PAD), const),                         # b3 (padded, narrow)
        ],
        out_specs=pl.BlockSpec((tb, OUT_PAD), lambda i: (i, 0)),       # narrow output
        compiler_params=pltpu.CompilerParams(
            dimension_semantics=("parallel",),
            vmem_limit_bytes=32 * 1024 * 1024,
        ),
        cost_estimate=pl.CostEstimate(
            flops=flops, transcendentals=0, bytes_accessed=bytes_accessed),
    )(x, w1, b1, w2, b2, w3, b3)

    # Only the first 3 columns are logits.
    return out[:, :OUTPUT_DIM]


def init_params(key):
    """Deterministic init mimicking PyTorch's default U(-1/sqrt(fan_in), 1/sqrt(fan_in))."""
    ks = jax.random.split(key, 6)

    def linear(kw, kb, fan_in, fan_out):
        bound = 1.0 / jnp.sqrt(fan_in)
        w = jax.random.uniform(kw, (fan_in, fan_out), jnp.float32, -bound, bound)
        b = jax.random.uniform(kb, (1, fan_out), jnp.float32, -bound, bound)
        return w, b

    w1, b1 = linear(ks[0], ks[1], INPUT_DIM, HIDDEN_DIM)
    w2, b2 = linear(ks[2], ks[3], HIDDEN_DIM, HIDDEN_DIM)
    w3, b3 = linear(ks[4], ks[5], HIDDEN_DIM, OUTPUT_DIM)
    return {"w1": w1, "b1": b1, "w2": w2, "b2": b2, "w3": w3, "b3": b3}


def _reference_forward(x, p):
    h1 = jnp.maximum(x @ p["w1"] + p["b1"], 0.0)
    h2 = jnp.maximum(h1 @ p["w2"] + p["b2"], 0.0)
    return h2 @ p["w3"] + p["b3"]


if __name__ == "__main__":
    key = jax.random.PRNGKey(0)
    k_params, k_x = jax.random.split(key)

    raw_params = init_params(k_params)
    params = prepare_params(raw_params)   # pad output layer once, outside jit

    # Small batch consistent with the module (8 wine samples, 13 features).
    x = jax.random.normal(k_x, (8, INPUT_DIM), dtype=jnp.float32)

    out = jax.block_until_ready(wine_classifier_forward(x, params))
    ref = _reference_forward(x, raw_params)
    assert out.shape == (8, OUTPUT_DIM)
    assert jnp.allclose(out, ref, atol=1e-5, rtol=1e-5)

    # Also exercise the tiled path: a ragged batch spanning >1 grid step.
    x_big = jax.random.normal(k_x, (1000, INPUT_DIM), dtype=jnp.float32)
    out_big = jax.block_until_ready(
        wine_classifier_forward(x_big, params, tile_b=256))
    ref_big = _reference_forward(x_big, raw_params)
    assert out_big.shape == (1000, OUTPUT_DIM)
    assert jnp.allclose(out_big, ref_big, atol=1e-4, rtol=1e-4)

    print("KERNEL_OK")
</pallas_src>

<mosaic_0001>
module attributes {stable_mosaic.version = 11 : i64} {
  func.func @_mlp_kernel(%arg0: i32, %arg1: memref<8x13xf32, #tpu.memory_space<vmem>>, %arg2: memref<13x64xf32, #tpu.memory_space<vmem>>, %arg3: memref<1x64xf32, #tpu.memory_space<vmem>>, %arg4: memref<64x64xf32, #tpu.memory_space<vmem>>, %arg5: memref<1x64xf32, #tpu.memory_space<vmem>>, %arg6: memref<64x8xf32, #tpu.memory_space<vmem>>, %arg7: memref<1x8xf32, #tpu.memory_space<vmem>>, %arg8: memref<8x8xf32, #tpu.memory_space<vmem>>) attributes {dimension_semantics = [#tpu.dimension_semantics<parallel>], iteration_bounds = array<i64: 1>, scalar_prefetch = 0 : i64, scratch_operands = 0 : i64, tpu.core_type = #tpu.core_type<tc>, window_params = [{transform_indices = @transform_0, window_bounds = array<i64: 8, 13>}, {pipeline_mode = #tpu.pipeline_mode<synchronous>, transform_indices = @transform_1, window_bounds = array<i64: 13, 64>}, {pipeline_mode = #tpu.pipeline_mode<synchronous>, transform_indices = @transform_2, window_bounds = array<i64: 1, 64>}, {pipeline_mode = #tpu.pipeline_mode<synchronous>, transform_indices = @transform_3, window_bounds = array<i64: 64, 64>}, {pipeline_mode = #tpu.pipeline_mode<synchronous>, transform_indices = @transform_4, window_bounds = array<i64: 1, 64>}, {pipeline_mode = #tpu.pipeline_mode<synchronous>, transform_indices = @transform_5, window_bounds = array<i64: 64, 8>}, {pipeline_mode = #tpu.pipeline_mode<synchronous>, transform_indices = @transform_6, window_bounds = array<i64: 1, 8>}, {transform_indices = @transform_7, window_bounds = array<i64: 8, 8>}]} {
    %c0 = arith.constant 0 : index
    %c0_0 = arith.constant 0 : index
    %0 = vector.load %arg1[%c0, %c0_0] : memref<8x13xf32, #tpu.memory_space<vmem>>, vector<8x13xf32>
    %c0_1 = arith.constant 0 : index
    %c0_2 = arith.constant 0 : index
    %1 = vector.load %arg2[%c0_1, %c0_2] : memref<13x64xf32, #tpu.memory_space<vmem>>, vector<13x64xf32>
    %cst = arith.constant dense<0.000000e+00> : vector<8x64xf32>
    %2 = tpu.matmul %0, %1, %cst {dimension_numbers = #tpu.dot_dimension_numbers<[1], [0], [0], [1], [0, 0, 1, 1], [], []>} : vector<8x13xf32>, vector<13x64xf32>, vector<8x64xf32> -> vector<8x64xf32>
    %c0_3 = arith.constant 0 : index
    %c0_4 = arith.constant 0 : index
    %3 = vector.load %arg3[%c0_3, %c0_4] : memref<1x64xf32, #tpu.memory_space<vmem>>, vector<1x64xf32>
    %4 = vector.broadcast %3 : vector<1x64xf32> to vector<8x64xf32>
    %5 = arith.addf %2, %4 : vector<8x64xf32>
    %cst_5 = arith.constant 0.000000e+00 : f32
    %6 = vector.broadcast %cst_5 : f32 to vector<8x64xf32>
    %7 = arith.maximumf %5, %6 : vector<8x64xf32>
    %c0_6 = arith.constant 0 : index
    %c0_7 = arith.constant 0 : index
    %8 = vector.load %arg4[%c0_6, %c0_7] : memref<64x64xf32, #tpu.memory_space<vmem>>, vector<64x64xf32>
    %cst_8 = arith.constant dense<0.000000e+00> : vector<8x64xf32>
    %9 = tpu.matmul %7, %8, %cst_8 {dimension_numbers = #tpu.dot_dimension_numbers<[1], [0], [0], [1], [0, 0, 1, 1], [], []>} : vector<8x64xf32>, vector<64x64xf32>, vector<8x64xf32> -> vector<8x64xf32>
    %c0_9 = arith.constant 0 : index
    %c0_10 = arith.constant 0 : index
    %10 = vector.load %arg5[%c0_9, %c0_10] : memref<1x64xf32, #tpu.memory_space<vmem>>, vector<1x64xf32>
    %11 = vector.broadcast %10 : vector<1x64xf32> to vector<8x64xf32>
    %12 = arith.addf %9, %11 : vector<8x64xf32>
    %cst_11 = arith.constant 0.000000e+00 : f32
    %13 = vector.broadcast %cst_11 : f32 to vector<8x64xf32>
    %14 = arith.maximumf %12, %13 : vector<8x64xf32>
    %c0_12 = arith.constant 0 : index
    %c0_13 = arith.constant 0 : index
    %15 = vector.load %arg6[%c0_12, %c0_13] : memref<64x8xf32, #tpu.memory_space<vmem>>, vector<64x8xf32>
    %cst_14 = arith.constant dense<0.000000e+00> : vector<8x8xf32>
    %16 = tpu.matmul %14, %15, %cst_14 {dimension_numbers = #tpu.dot_dimension_numbers<[1], [0], [0], [1], [0, 0, 1, 1], [], []>} : vector<8x64xf32>, vector<64x8xf32>, vector<8x8xf32> -> vector<8x8xf32>
    %c0_15 = arith.constant 0 : index
    %c0_16 = arith.constant 0 : index
    %17 = vector.load %arg7[%c0_15, %c0_16] : memref<1x8xf32, #tpu.memory_space<vmem>>, vector<1x8xf32>
    %18 = vector.broadcast %17 : vector<1x8xf32> to vector<8x8xf32>
    %19 = arith.addf %16, %18 : vector<8x8xf32>
    %c0_17 = arith.constant 0 : index
    %c0_18 = arith.constant 0 : index
    %20 = vector.load %arg8[%c0_17, %c0_18] : memref<8x8xf32, #tpu.memory_space<vmem>>, vector<8x8xf32>
    tpu.vector_store %arg8[%c0_17, %c0_18], %19 {strides = array<i32>} : memref<8x8xf32, #tpu.memory_space<vmem>>, vector<8x8xf32>,
    return
  }
  func.func @transform_0(%arg0: i32) -> (i32, i32) {
    %c0_i32 = arith.constant 0 : i32
    %c0_i32_0 = arith.constant 0 : i32
    return %arg0, %c0_i32 : i32, i32
  }
  func.func @transform_1(%arg0: i32) -> (i32, i32) {
    %c0_i32 = arith.constant 0 : i32
    %c0_i32_0 = arith.constant 0 : i32
    %c0_i32_1 = arith.constant 0 : i32
    return %c0_i32, %c0_i32_0 : i32, i32
  }
  func.func @transform_2(%arg0: i32) -> (i32, i32) {
    %c0_i32 = arith.constant 0 : i32
    %c0_i32_0 = arith.constant 0 : i32
    %c0_i32_1 = arith.constant 0 : i32
    return %c0_i32, %c0_i32_0 : i32, i32
  }
  func.func @transform_3(%arg0: i32) -> (i32, i32) {
    %c0_i32 = arith.constant 0 : i32
    %c0_i32_0 = arith.constant 0 : i32
    %c0_i32_1 = arith.constant 0 : i32
    return %c0_i32, %c0_i32_0 : i32, i32
  }
  func.func @transform_4(%arg0: i32) -> (i32, i32) {
    %c0_i32 = arith.constant 0 : i32
    %c0_i32_0 = arith.constant 0 : i32
    %c0_i32_1 = arith.constant 0 : i32
    return %c0_i32, %c0_i32_0 : i32, i32
  }
  func.func @transform_5(%arg0: i32) -> (i32, i32) {
    %c0_i32 = arith.constant 0 : i32
    %c0_i32_0 = arith.constant 0 : i32
    %c0_i32_1 = arith.constant 0 : i32
    return %c0_i32, %c0_i32_0 : i32, i32
  }
  func.func @transform_6(%arg0: i32) -> (i32, i32) {
    %c0_i32 = arith.constant 0 : i32
    %c0_i32_0 = arith.constant 0 : i32
    %c0_i32_1 = arith.constant 0 : i32
    return %c0_i32, %c0_i32_0 : i32, i32
  }
  func.func @transform_7(%arg0: i32) -> (i32, i32) {
    %c0_i32 = arith.constant 0 : i32
    %c0_i32_0 = arith.constant 0 : i32
    return %arg0, %c0_i32 : i32, i32
  }
}

</mosaic_0001>

<llo_original>
// kernel: wine_classifier_forward.1
$region0: #{wine_classifier_forward.1}
  #allocation0 [shape = 'u32[]', space=smem, size = 0x4, offset = 0x4, fixed_abs, tag = 'smem constant byte address 0x4 - core index']
  #allocation1 [shape = 'u32[144,128]{1,0:T(1,128)}', space=vmem, size = 0x12000, scoped, tag = 'internal scratch']
  %s0 = inlined_call_operand.hbm [shape: f32[8,13], index: 0, kind: input, shape index: {}]
  %s1 = inlined_call_operand.vmem [shape: f32[13,64], index: 1, kind: input, shape index: {}]
  %s2 = inlined_call_operand.vmem [shape: f32[1,64], index: 2, kind: input, shape index: {}]
  %s3 = inlined_call_operand.vmem [shape: f32[64,64], index: 3, kind: input, shape index: {}]
  %s4 = inlined_call_operand.vmem [shape: f32[1,64], index: 4, kind: input, shape index: {}]
  %s5 = inlined_call_operand.vmem [shape: f32[64,8], index: 5, kind: input, shape index: {}]
  %s6 = inlined_call_operand.vmem [shape: f32[1,8], index: 6, kind: input, shape index: {}]
  %s7 = inlined_call_operand.vmem [shape: f32[8,8], index: 7, kind: output, shape index: {}]
  %s8 = sld [smem:[#allocation0]]
  $region42: #{wine_classifier_forward.1} parent=0
    _
  %s10 = ssub.s32 1, %s8
  %s11 = scalar_select 0, %s10, %s8
  $region1: #{wine_classifier_forward.1} parent=0
    #allocation2 [shape = 'u8[4096]{0}', space=vmem, size = 0x1000, scoped, tag = 'input window, operand 0, single buffered']
    #allocation3 [shape = 's32[1]{0}', space=sflag, size = 0x4, scoped, tag = 'scoped memory for wine_classifier_forward.1']
    %12 = vsyncpa [#allocation3], 0
    // Predicated region
    $region2: #{wine_classifier_forward.1} parent=1 // pred_check
      _
    $region3: #{wine_classifier_forward.1} parent=1 // pred_check_branch
      %14 = sbr.rel (0) target = $region5
    $region4: #{wine_classifier_forward.1} parent=1 // pred_region
      %s16 = ssub.s32 128, 128
      %17 = vsyncadd [#allocation3], %s16
      %s19 = sshll.u32 [#allocation2], 4
      %s20 = int_to_ptr.vmem [resolvable:$true] %s19
      %22 = dma.hbm_to_vmem [thread:$0]  %s0, 128, %s20, [#allocation3]
    $region5: #{wine_classifier_forward.1} parent=1 // pred_fallthru
      _
    // Predicated region
    $region6: #{wine_classifier_forward.1} parent=1 // pred_check
      _
    $region7: #{wine_classifier_forward.1} parent=1 // pred_check_branch
      %24 = sbr.rel (0) target = $region9
    $region8: #{wine_classifier_forward.1} parent=1 // pred_region
      _
    $region9: #{wine_classifier_forward.1} parent=1 // pred_fallthru
      _
    // Predicated region
    $region10: #{wine_classifier_forward.1} parent=1 // pred_check
      _
    $region11: #{wine_classifier_forward.1} parent=1 // pred_check_branch
      %26 = sbr.rel (0) target = $region13
    $region12: #{wine_classifier_forward.1} parent=1 // pred_region
      _
    $region13: #{wine_classifier_forward.1} parent=1 // pred_fallthru
      _
    // Predicated region
    $region14: #{wine_classifier_forward.1} parent=1 // pred_check
      _
    $region15: #{wine_classifier_forward.1} parent=1 // pred_check_branch
      %28 = sbr.rel (0) target = $region17
    $region16: #{wine_classifier_forward.1} parent=1 // pred_region
      _
    $region17: #{wine_classifier_forward.1} parent=1 // pred_fallthru
      _
    // Predicated region
    $region18: #{wine_classifier_forward.1} parent=1 // pred_check
      _
    $region19: #{wine_classifier_forward.1} parent=1 // pred_check_branch
      %30 = sbr.rel (0) target = $region21
    $region20: #{wine_classifier_forward.1} parent=1 // pred_region
      _
    $region21: #{wine_classifier_forward.1} parent=1 // pred_fallthru
      _
    // Predicated region
    $region22: #{wine_classifier_forward.1} parent=1 // pred_check
      _
    $region23: #{wine_classifier_forward.1} parent=1 // pred_check_branch
      %32 = sbr.rel (0) target = $region25
    $region24: #{wine_classifier_forward.1} parent=1 // pred_region
      _
    $region25: #{wine_classifier_forward.1} parent=1 // pred_fallthru
      _
    // Predicated region
    $region26: #{wine_classifier_forward.1} parent=1 // pred_check
      _
    $region27: #{wine_classifier_forward.1} parent=1 // pred_check_branch
      %34 = sbr.rel (0) target = $region29
    $region28: #{wine_classifier_forward.1} parent=1 // pred_region
      _
    $region29: #{wine_classifier_forward.1} parent=1 // pred_fallthru
      _
    // Predicated region
    $region30: #{wine_classifier_forward.1} parent=1 // pred_check
      _
    $region31: #{wine_classifier_forward.1} parent=1 // pred_check_branch
      %36 = sbr.rel (0) target = $region33
    $region32: #{wine_classifier_forward.1} parent=1 // pred_region
      %37 = dma.done [#allocation3], 128
    $region33: #{wine_classifier_forward.1} parent=1 // pred_fallthru
      _
    %v38 = vld [vmem:[#allocation2] sm:$0xff]
    %v39 = vld [vmem:[%s1] sm:$0xff]
    %v40 = vld [vmem:[%s1 + $0x8] sm:$0x1f]
    %v41 = vld [vmem:[%s2] sm:$0x1]
    %v43 = vlaneseq
    %v44 = vshrl.u32 %v43, 7
    %v45 = vsub.s32 0, %v44
    %v46 = vrot.slane %v41, %v45
    %vm48 = vcmask 105472
    %v50 = vsel %vm48, %v38, 0
    %vm52 = vcmask 1044480
    %v54 = vsel %vm52, %v40, 0
    %56 = vmatprep.subr.mxu0 0.0
    %57 = vmatpush1.msra.mxu0 %v39
    %58 = vmatprep.subr.mxu0 0.0
    %59 = vmatpush1.msra.mxu0 %v54
    %60 = vmatprep.subr.mxu0 0.0
    %61 = vmatpush1.msra.mxu0 0.0
    %62 = vmatprep.subr.mxu0 0.0
    %63 = vmatpush1.msra.mxu0 0.0
    %64 = vmatprep.subr.mxu0 0.0
    %65 = vmatpush1.msra.mxu0 0.0
    %66 = vmatprep.subr.mxu0 0.0
    %67 = vmatpush1.msra.mxu0 0.0
    %68 = vmatprep.subr.mxu0 0.0
    %69 = vmatpush1.msra.mxu0 0.0
    %70 = vmatprep.subr.mxu0 0.0
    %71 = vmatpush1.msra.mxu0 0.0
    %72 = vmatprep.subr.mxu0 0.0
    %73 = vmatpush1.msra.mxu0 0.0
    %74 = vmatprep.subr.mxu0 0.0
    %75 = vmatpush1.msra.mxu0 0.0
    %76 = vmatprep.subr.mxu0 0.0
    %77 = vmatpush1.msra.mxu0 0.0
    %78 = vmatprep.subr.mxu0 0.0
    %79 = vmatpush1.msra.mxu0 0.0
    %80 = vmatprep.subr.mxu0 0.0
    %81 = vmatpush1.msra.mxu0 0.0
    %82 = vmatprep.subr.mxu0 0.0
    %83 = vmatpush1.msra.mxu0 0.0
    %84 = vmatprep.subr.mxu0 0.0
    %85 = vmatpush1.msra.mxu0 0.0
    %86 = vmatprep.subr.mxu0 0.0
    %87 = vmatpush1.msra.mxu0 0.0
    %88 = vmatprep.subr.mxu0 0.0
    %89 = vmatpush1.msra.mxu0 0.0
    %90 = vmatprep.subr.mxu0 0.0
    %91 = vmatpush1.msra.mxu0 0.0
    %92 = vmatprep.subr.mxu0 0.0
    %93 = vmatpush1.msra.mxu0 0.0
    %94 = vmatprep.subr.mxu0 0.0
    %95 = vmatpush1.msra.mxu0 0.0
    %96 = vmatprep.subr.mxu0 0.0
    %97 = vmatpush1.msra.mxu0 0.0
    %98 = vmatprep.subr.mxu0 0.0
    %99 = vmatpush1.msra.mxu0 0.0
    %100 = vmatprep.subr.mxu0 0.0
    %101 = vmatpush1.msra.mxu0 0.0
    %102 = vmatprep.subr.mxu0 0.0
    %103 = vmatpush1.msra.mxu0 0.0
    %104 = vmatprep.subr.mxu0 0.0
    %105 = vmatpush1.msra.mxu0 0.0
    %106 = vmatprep.subr.mxu0 0.0
    %107 = vmatpush1.msra.mxu0 0.0
    %108 = vmatprep.subr.mxu0 0.0
    %109 = vmatpush1.msra.mxu0 0.0
    %110 = vmatprep.subr.mxu0 0.0
    %111 = vmatpush1.msra.mxu0 0.0
    %112 = vmatprep.subr.mxu0 0.0
    %113 = vmatpush1.msra.mxu0 0.0
    %114 = vmatprep.subr.mxu0 0.0
    %115 = vmatpush1.msra.mxu0 0.0
    %116 = vmatprep.subr.mxu0 0.0
    %117 = vmatpush1.msra.mxu0 0.0
    %118 = vmatprep.subr.mxu0 0.0
    %119 = vmatpush1.msra.mxu0 0.0
    %120 = vmatprep.mubr.f32.mxu0 0.0
    %121 = vmatmul.mubr.f32.gmra.mrb[0].mxu0 %v50
    %v122 = vpop.f32.mrb[0].mxu0
    %v123 = vadd.f32 %v46, %v122
    %v124 = vpop.f32.mrb[0].mxu0
    %125 = vdwg.mxu0
    %v126 = vmax.f32 %v123, 0.0
    %v127 = vld [vmem:[%s3] sm:$0xff]
    %v128 = vld [vmem:[%s3 + $0x8] sm:$0xff]
    %v129 = vld [vmem:[%s3 + $0x10] sm:$0xff]
    %v130 = vld [vmem:[%s3 + $0x18] sm:$0xff]
    %v131 = vld [vmem:[%s3 + $0x20] sm:$0xff]
    %v132 = vld [vmem:[%s3 + $0x28] sm:$0xff]
    %v133 = vld [vmem:[%s3 + $0x30] sm:$0xff]
    %v134 = vld [vmem:[%s3 + $0x38] sm:$0xff]
    %v135 = vld [vmem:[%s4] sm:$0x1]
    %v137 = vlaneseq
    %v138 = vshrl.u32 %v137, 7
    %v139 = vsub.s32 0, %v138
    %v140 = vrot.slane %v135, %v139
    %vm142 = vcmask 523264
    %v144 = vsel %vm142, %v126, 0
    %146 = vmatprep.subr.mxu0 0.0
    %147 = vmatpush1.msra.mxu0 %v127
    %148 = vmatprep.subr.mxu0 0.0
    %149 = vmatpush1.msra.mxu0 %v128
    %150 = vmatprep.subr.mxu0 0.0
    %151 = vmatpush1.msra.mxu0 %v129
    %152 = vmatprep.subr.mxu0 0.0
    %153 = vmatpush1.msra.mxu0 %v130
    %154 = vmatprep.subr.mxu0 0.0
    %155 = vmatpush1.msra.mxu0 %v131
    %156 = vmatprep.subr.mxu0 0.0
    %157 = vmatpush1.msra.mxu0 %v132
    %158 = vmatprep.subr.mxu0 0.0
    %159 = vmatpush1.msra.mxu0 %v133
    %160 = vmatprep.subr.mxu0 0.0
    %161 = vmatpush1.msra.mxu0 %v134
    %162 = vmatprep.subr.mxu0 0.0
    %163 = vmatpush1.msra.mxu0 0.0
    %164 = vmatprep.subr.mxu0 0.0
    %165 = vmatpush1.msra.mxu0 0.0
    %166 = vmatprep.subr.mxu0 0.0
    %167 = vmatpush1.msra.mxu0 0.0
    %168 = vmatprep.subr.mxu0 0.0
    %169 = vmatpush1.msra.mxu0 0.0
    %170 = vmatprep.subr.mxu0 0.0
    %171 = vmatpush1.msra.mxu0 0.0
    %172 = vmatprep.subr.mxu0 0.0
    %173 = vmatpush1.msra.mxu0 0.0
    %174 = vmatprep.subr.mxu0 0.0
    %175 = vmatpush1.msra.mxu0 0.0
    %176 = vmatprep.subr.mxu0 0.0
    %177 = vmatpush1.msra.mxu0 0.0
    %178 = vmatprep.subr.mxu0 0.0
    %179 = vmatpush1.msra.mxu0 0.0
    %180 = vmatprep.subr.mxu0 0.0
    %181 = vmatpush1.msra.mxu0 0.0
    %182 = vmatprep.subr.mxu0 0.0
    %183 = vmatpush1.msra.mxu0 0.0
    %184 = vmatprep.subr.mxu0 0.0
    %185 = vmatpush1.msra.mxu0 0.0
    %186 = vmatprep.subr.mxu0 0.0
    %187 = vmatpush1.msra.mxu0 0.0
    %188 = vmatprep.subr.mxu0 0.0
    %189 = vmatpush1.msra.mxu0 0.0
    %190 = vmatprep.subr.mxu0 0.0
    %191 = vmatpush1.msra.mxu0 0.0
    %192 = vmatprep.subr.mxu0 0.0
    %193 = vmatpush1.msra.mxu0 0.0
    %194 = vmatprep.subr.mxu0 0.0
    %195 = vmatpush1.msra.mxu0 0.0
    %196 = vmatprep.subr.mxu0 0.0
    %197 = vmatpush1.msra.mxu0 0.0
    %198 = vmatprep.subr.mxu0 0.0
    %199 = vmatpush1.msra.mxu0 0.0
    %200 = vmatprep.subr.mxu0 0.0
    %201 = vmatpush1.msra.mxu0 0.0
    %202 = vmatprep.subr.mxu0 0.0
    %203 = vmatpush1.msra.mxu0 0.0
    %204 = vmatprep.subr.mxu0 0.0
    %205 = vmatpush1.msra.mxu0 0.0
    %206 = vmatprep.subr.mxu0 0.0
    %207 = vmatpush1.msra.mxu0 0.0
    %208 = vmatprep.subr.mxu0 0.0
    %209 = vmatpush1.msra.mxu0 0.0
    %210 = vmatprep.mubr.f32.mxu0 0.0
    %211 = vmatmul.mubr.f32.gmra.mrb[0].mxu0 %v144
    %v212 = vpop.f32.mrb[0].mxu0
    %v213 = vadd.f32 %v140, %v212
    %v214 = vpop.f32.mrb[0].mxu0
    %215 = vdwg.mxu0
    %v216 = vmax.f32 %v213, 0.0
    %v217 = vld [vmem:[%s5] sm:$0xff]
    %v218 = vld [vmem:[%s5 + $0x8] sm:$0xff]
    %v219 = vld [vmem:[%s5 + $0x10] sm:$0xff]
    %v220 = vld [vmem:[%s5 + $0x18] sm:$0xff]
    %v221 = vld [vmem:[%s5 + $0x20] sm:$0xff]
    %v222 = vld [vmem:[%s5 + $0x28] sm:$0xff]
    %v223 = vld [vmem:[%s5 + $0x30] sm:$0xff]
    %v224 = vld [vmem:[%s5 + $0x38] sm:$0xff]
    %v225 = vld [vmem:[%s6] sm:$0x1]
    %v227 = vlaneseq
    %v228 = vshrl.u32 %v227, 7
    %v229 = vsub.s32 0, %v228
    %v230 = vrot.slane %v225, %v229
    %v233 = vsel %vm142, %v216, 0
    %235 = vmatprep.subr.mxu0 0.0
    %236 = vmatpush1.msra.mxu0 %v217
    %237 = vmatprep.subr.mxu0 0.0
    %238 = vmatpush1.msra.mxu0 %v218
    %239 = vmatprep.subr.mxu0 0.0
    %240 = vmatpush1.msra.mxu0 %v219
    %241 = vmatprep.subr.mxu0 0.0
    %242 = vmatpush1.msra.mxu0 %v220
    %243 = vmatprep.subr.mxu0 0.0
    %244 = vmatpush1.msra.mxu0 %v221
    %245 = vmatprep.subr.mxu0 0.0
    %246 = vmatpush1.msra.mxu0 %v222
    %247 = vmatprep.subr.mxu0 0.0
    %248 = vmatpush1.msra.mxu0 %v223
    %249 = vmatprep.subr.mxu0 0.0
    %250 = vmatpush1.msra.mxu0 %v224
    %251 = vmatprep.subr.mxu0 0.0
    %252 = vmatpush1.msra.mxu0 0.0
    %253 = vmatprep.subr.mxu0 0.0
    %254 = vmatpush1.msra.mxu0 0.0
    %255 = vmatprep.subr.mxu0 0.0
    %256 = vmatpush1.msra.mxu0 0.0
    %257 = vmatprep.subr.mxu0 0.0
    %258 = vmatpush1.msra.mxu0 0.0
    %259 = vmatprep.subr.mxu0 0.0
    %260 = vmatpush1.msra.mxu0 0.0
    %261 = vmatprep.subr.mxu0 0.0
    %262 = vmatpush1.msra.mxu0 0.0
    %263 = vmatprep.subr.mxu0 0.0
    %264 = vmatpush1.msra.mxu0 0.0
    %265 = vmatprep.subr.mxu0 0.0
    %266 = vmatpush1.msra.mxu0 0.0
    %267 = vmatprep.subr.mxu0 0.0
    %268 = vmatpush1.msra.mxu0 0.0
    %269 = vmatprep.subr.mxu0 0.0
    %270 = vmatpush1.msra.mxu0 0.0
    %271 = vmatprep.subr.mxu0 0.0
    %272 = vmatpush1.msra.mxu0 0.0
    %273 = vmatprep.subr.mxu0 0.0
    %274 = vmatpush1.msra.mxu0 0.0
    %275 = vmatprep.subr.mxu0 0.0
    %276 = vmatpush1.msra.mxu0 0.0
    %277 = vmatprep.subr.mxu0 0.0
    %278 = vmatpush1.msra.mxu0 0.0
    %279 = vmatprep.subr.mxu0 0.0
    %280 = vmatpush1.msra.mxu0 0.0
    %281 = vmatprep.subr.mxu0 0.0
    %282 = vmatpush1.msra.mxu0 0.0
    %283 = vmatprep.subr.mxu0 0.0
    %284 = vmatpush1.msra.mxu0 0.0
    %285 = vmatprep.subr.mxu0 0.0
    %286 = vmatpush1.msra.mxu0 0.0
    %287 = vmatprep.subr.mxu0 0.0
    %288 = vmatpush1.msra.mxu0 0.0
    %289 = vmatprep.subr.mxu0 0.0
    %290 = vmatpush1.msra.mxu0 0.0
    %291 = vmatprep.subr.mxu0 0.0
    %292 = vmatpush1.msra.mxu0 0.0
    %293 = vmatprep.subr.mxu0 0.0
    %294 = vmatpush1.msra.mxu0 0.0
    %295 = vmatprep.subr.mxu0 0.0
    %296 = vmatpush1.msra.mxu0 0.0
    %297 = vmatprep.subr.mxu0 0.0
    %298 = vmatpush1.msra.mxu0 0.0
    %299 = vmatprep.mubr.f32.mxu0 0.0
    %300 = vmatmul.mubr.f32.gmra.mrb[0].mxu0 %v233
    %v301 = vpop.f32.mrb[0].mxu0
    %v302 = vadd.f32 %v230, %v301
    %v303 = vpop.f32.mrb[0].mxu0
    %304 = vdwg.mxu0
    %vm305 = vcmask 64512
    %306 = vst.msk [vmem:[%s7] sm:$0xff] %vm305, %v302
    // Predicated region
    $region34: #{wine_classifier_forward.1} parent=1 // pred_check
      _
    $region35: #{wine_classifier_forward.1} parent=1 // pred_check_branch
      %308 = sbr.rel (0) target = $region37
    $region36: #{wine_classifier_forward.1} parent=1 // pred_region
      _
    $region37: #{wine_classifier_forward.1} parent=1 // pred_fallthru
      _
    // Predicated region
    $region38: #{wine_classifier_forward.1} parent=1 // pred_check
      _
    $region39: #{wine_classifier_forward.1} parent=1 // pred_check_branch
      %310 = sbr.rel (0) target = $region41
    $region40: #{wine_classifier_forward.1} parent=1 // pred_region
      _
    $region41: #{wine_classifier_forward.1} parent=1 // pred_fallthru
      _
    %311 = vsyncpa [#allocation3], 1

</llo_original>
